<compile_context>
chip_gen: v7x
topology: tpu7x:2x2x1
jax: 0.10.0
libtpu: 0.0.40
codegen_flags: <defaults>
</compile_context>

<pallas_src>
import functools

import jax
import jax.numpy as jnp
from jax.experimental import pallas as pl
from jax.experimental.pallas import tpu as pltpu

_LANE = 128                     # lane width: feature dims padded to multiples of this
_SUBLANE_F32 = 8                # f32 sublane granularity; scaled for narrow dtypes
_MAX_TILE_B = 512               # ~85% of HBM roofline measured at 512-row tiles
_ACT_VMEM_BUDGET = 16 << 20     # cap on the double-buffered x/o blocks
_VMEM_FLOOR = 16 << 20
_VMEM_CEIL = 64 << 20           # portable across v5e/v6e (128 MiB) and v7x (64 MiB)


def _round_up(n, m):
    return ((n + m - 1) // m) * m


def _sublanes(dtype):
    """Native sublane packing: 8 rows for 4-byte, 16 for 2-byte, 32 for 1-byte."""
    itemsize = jnp.dtype(dtype).itemsize
    return max(_SUBLANE_F32, (4 // max(itemsize, 1)) * _SUBLANE_F32)


def _pad_to(a, shape):
    """Zero-pad `a` up to `shape` (trailing pad only).  Zero fill is required:
    zero cols of W1 -> relu(0)=0 -> zero rows of W2 contribute nothing."""
    pads = [(0, t - s) for s, t in zip(a.shape, shape)]
    if all(p == (0, 0) for p in pads):
        return a
    return jnp.pad(a, pads)


def _nbytes(a):
    return a.size * a.dtype.itemsize


def _clamp_vmem(need_bytes):
    """Scoped-VMEM limit: actual need + 50% headroom + 2 MiB, clamped."""
    return int(min(max(need_bytes + need_bytes // 2 + (2 << 20), _VMEM_FLOOR),
                   _VMEM_CEIL))


def _pick_tile_b(batch, sub, max_tile=_MAX_TILE_B):
    """Adaptive batch tile: as large as possible (roofline + per-step overhead
    amortization) while keeping batch-padding waste <= 12.5%; split the batch
    into two tiles when it would otherwise be a single tile so both v7x
    TensorCores get work on the 'parallel' axis."""
    b_sub = _round_up(max(batch, 1), sub)
    if b_sub <= max_tile:
        if b_sub >= 2 * sub and b_sub % (2 * sub) == 0:
            return b_sub // 2          # >= 2 waste-free grid steps
        return b_sub
    best_tile, best_waste = sub, None
    cand = max_tile
    while cand >= sub:
        c = _round_up(cand, sub)
        b_p = _round_up(b_sub, c)
        waste = b_p - b_sub
        if 8 * waste <= b_p:           # <= 12.5% padded rows
            return c
        if best_waste is None or waste < best_waste:
            best_tile, best_waste = c, waste
        cand //= 2
    return best_tile


def _pick_tile_h(hid_p, in_p, out_p, w_itemsize, budget):
    """Largest 128-multiple dividing hid_p whose double-buffered weight slices
    fit the weight budget; floor at one lane tile."""
    cand = hid_p
    while cand >= _LANE:
        if hid_p % cand == 0 and 2 * cand * (in_p + out_p + 1) * w_itemsize <= budget:
            return cand
        cand -= _LANE
    return _LANE


def _weight_spec(block_shape, index_map, single_buffer):
    """Constant-index blocks never re-DMA across the grid; request a single
    buffer to halve their VMEM footprint.  Fall back to the default double
    buffer if pipeline_mode / Buffered is unavailable in this jax version."""
    if single_buffer:
        try:
            return pl.BlockSpec(block_shape, index_map,
                                pipeline_mode=pl.Buffered(1))
        except Exception:
            pass
    return pl.BlockSpec(block_shape, index_map)


# ----------------------------------------------------------------------------
# Kernels
# ----------------------------------------------------------------------------
def _mlp_kernel_resident(x_ref, w1_ref, b1_ref, w2_ref, b2_ref, o_ref):
    # h = relu(x @ W1 + b1): MXU matmul, f32 accumulate, f32 VPU epilogue
    # (keeps v5e happy -- no bf16 VPU needed there).
    h = jnp.dot(x_ref[...], w1_ref[...], preferred_element_type=jnp.float32)
    h = jnp.maximum(h + b1_ref[...].astype(jnp.float32), 0.0)
    # y = h @ W2 + b2
    y = jnp.dot(h.astype(w2_ref.dtype), w2_ref[...],
                preferred_element_type=jnp.float32)
    o_ref[...] = (y + b2_ref[...].astype(jnp.float32)).astype(o_ref.dtype)


def _mlp_kernel_hidden_tiled(x_ref, w1_ref, b1_ref, w2_ref, b2_ref, o_ref,
                             acc_ref):
    # Grid axis 1 tiles the hidden dim; accumulate relu(x@W1_k + b1_k) @ W2_k
    # in an f32 scratch accumulator (valid because ReLU is elementwise per
    # hidden unit, so the hidden sum can be chunked).
    k = pl.program_id(1)

    @pl.when(k == 0)
    def _init():
        acc_ref[...] = jnp.zeros_like(acc_ref)

    h = jnp.dot(x_ref[...], w1_ref[...], preferred_element_type=jnp.float32)
    h = jnp.maximum(h + b1_ref[...].astype(jnp.float32), 0.0)
    acc_ref[...] += jnp.dot(h.astype(w2_ref.dtype), w2_ref[...],
                            preferred_element_type=jnp.float32)

    @pl.when(k == pl.num_programs(1) - 1)
    def _finalize():
        o_ref[...] = (acc_ref[...]
                      + b2_ref[...].astype(jnp.float32)).astype(o_ref.dtype)


# ----------------------------------------------------------------------------
# pallas_call wrappers (static tiling config)
# ----------------------------------------------------------------------------
@functools.partial(jax.jit,
                   static_argnames=("tile_b", "single_buffer_weights",
                                    "vmem_limit"))
def _mlp_resident(x_p, w1_p, b1_p, w2_p, b2_p, *, tile_b,
                  single_buffer_weights, vmem_limit):
    b_p, in_p = x_p.shape
    hid_p = w1_p.shape[1]
    out_p = w2_p.shape[1]

    cost = pl.CostEstimate(
        flops=2 * b_p * (in_p * hid_p + hid_p * out_p),
        transcendentals=0,
        bytes_accessed=(_nbytes(x_p) + _nbytes(w1_p) + _nbytes(b1_p)
                        + _nbytes(w2_p) + _nbytes(b2_p)
                        + b_p * out_p * x_p.dtype.itemsize),
    )

    return pl.pallas_call(
        _mlp_kernel_resident,
        out_shape=jax.ShapeDtypeStruct((b_p, out_p), x_p.dtype),
        grid_spec=pltpu.PrefetchScalarGridSpec(
            num_scalar_prefetch=0,
            grid=(b_p // tile_b,),
            in_specs=[
                # Activations stream per batch tile (default double buffering;
                # bump to pl.Buffered(3) only if profiling shows exposed DMA).
                pl.BlockSpec((tile_b, in_p), lambda i: (i, 0)),
                # Weights / biases: constant block index -> VMEM-resident and
                # single-buffered (no re-DMA across grid steps).
                _weight_spec((in_p, hid_p), lambda i: (0, 0), single_buffer_weights),
                _weight_spec((1, hid_p), lambda i: (0, 0), single_buffer_weights),
                _weight_spec((hid_p, out_p), lambda i: (0, 0), single_buffer_weights),
                _weight_spec((1, out_p), lambda i: (0, 0), single_buffer_weights),
            ],
            out_specs=pl.BlockSpec((tile_b, out_p), lambda i: (i, 0)),
        ),
        compiler_params=pltpu.CompilerParams(
            dimension_semantics=("parallel",),
            vmem_limit_bytes=vmem_limit,
        ),
        cost_estimate=cost,
    )(x_p, w1_p, b1_p, w2_p, b2_p)


@functools.partial(jax.jit,
                   static_argnames=("tile_b", "tile_h", "single_buffer_weights",
                                    "vmem_limit"))
def _mlp_hidden_tiled(x_p, w1_p, b1_p, w2_p, b2_p, *, tile_b, tile_h,
                      single_buffer_weights, vmem_limit):
    b_p, in_p = x_p.shape
    hid_p = w1_p.shape[1]
    out_p = w2_p.shape[1]
    n_bt = b_p // tile_b

    cost = pl.CostEstimate(
        flops=2 * b_p * (in_p * hid_p + hid_p * out_p),
        transcendentals=0,
        bytes_accessed=(_nbytes(x_p)
                        + n_bt * (_nbytes(w1_p) + _nbytes(b1_p) + _nbytes(w2_p))
                        + _nbytes(b2_p)
                        + b_p * out_p * x_p.dtype.itemsize),
    )

    return pl.pallas_call(
        _mlp_kernel_hidden_tiled,
        out_shape=jax.ShapeDtypeStruct((b_p, out_p), x_p.dtype),
        grid_spec=pltpu.PrefetchScalarGridSpec(
            num_scalar_prefetch=0,
            grid=(b_p // tile_b, hid_p // tile_h),
            in_specs=[
                # x resident across the hidden (reduction) axis.
                pl.BlockSpec((tile_b, in_p), lambda i, k: (i, 0)),
                # Hidden-dim slices of W1 / b1 / W2 stream along axis k.
                pl.BlockSpec((in_p, tile_h), lambda i, k: (0, k)),
                pl.BlockSpec((1, tile_h), lambda i, k: (0, k)),
                pl.BlockSpec((tile_h, out_p), lambda i, k: (k, 0)),
                # b2 is constant -> single buffer.
                _weight_spec((1, out_p), lambda i, k: (0, 0), single_buffer_weights),
            ],
            out_specs=pl.BlockSpec((tile_b, out_p), lambda i, k: (i, 0)),
            scratch_shapes=[pltpu.VMEM((tile_b, out_p), jnp.float32)],
        ),
        compiler_params=pltpu.CompilerParams(
            dimension_semantics=("parallel", "arbitrary"),
            vmem_limit_bytes=vmem_limit,
        ),
        cost_estimate=cost,
    )(x_p, w1_p, b1_p, w2_p, b2_p)


# ----------------------------------------------------------------------------
# Public entry point
# ----------------------------------------------------------------------------
def mlp_forward(x, w1, b1, w2, b2, *, tile_b=None, compute_dtype=None,
                weight_budget_bytes=24 << 20):
    """Fused Linear -> ReLU -> Linear (MLP readout).

    x: [B, in_dim]; w1: [in_dim, hidden]; b1: [hidden] or [1, hidden];
    w2: [hidden, out_dim]; b2: [out_dim] or [1, out_dim] -> [B, out_dim].
    Weights are stored transposed vs. PyTorch so the kernel computes x @ W + b.
    compute_dtype: optionally cast x / weights (e.g. jnp.bfloat16 on v6e/v7x
    to feed the MXU at full rate); accumulation and epilogue stay f32.
    """
    if b1.ndim == 1:
        b1 = b1[None, :]
    if b2.ndim == 1:
        b2 = b2[None, :]
    if compute_dtype is not None:
        x = x.astype(compute_dtype)
        w1, b1, w2, b2 = (a.astype(compute_dtype) for a in (w1, b1, w2, b2))

    batch, in_dim = x.shape
    hidden = w1.shape[1]
    out_dim = w2.shape[1]

    # Lane-dense padded feature dims (no masked vst.msk partial stores).
    in_p = _round_up(in_dim, _LANE)
    hid_p = _round_up(hidden, _LANE)
    out_p = _round_up(out_dim, _LANE)

    # Dtype-aware batch tiling (8 / 16 / 32 sublane rounding).
    sub = _sublanes(x.dtype)
    if tile_b is None:
        tile_b = _pick_tile_b(batch, sub)
    else:
        tile_b = _round_up(max(int(tile_b), sub), sub)
    x_item = x.dtype.itemsize
    # Keep the double-buffered x/o blocks inside a fixed VMEM budget.
    while tile_b > sub and 2 * tile_b * (in_p + out_p) * x_item > _ACT_VMEM_BUDGET:
        tile_b = max(sub, _round_up(tile_b // 2, sub))
    b_p = _round_up(_round_up(batch, sub), tile_b)

    x_p = _pad_to(x, (b_p, in_p))
    w1_p = _pad_to(w1, (in_p, hid_p))
    b1_p = _pad_to(b1, (1, hid_p))
    w2_p = _pad_to(w2, (hid_p, out_p))
    b2_p = _pad_to(b2, (1, out_p))

    w_item = w1_p.dtype.itemsize
    b_item = b1_p.dtype.itemsize
    weight_bytes = ((in_p * hid_p + hid_p * out_p) * w_item
                    + (hid_p + out_p) * b_item)
    act_bytes = 2 * tile_b * (in_p + out_p) * x_item

    if weight_bytes <= weight_budget_bytes:
        # Both weight matrices stay VMEM-resident across the batch grid.
        def run(single_buffer):
            wbuf = 1 if single_buffer else 2
            return _mlp_resident(
                x_p, w1_p, b1_p, w2_p, b2_p,
                tile_b=tile_b, single_buffer_weights=single_buffer,
                vmem_limit=_clamp_vmem(act_bytes + wbuf * weight_bytes))
    else:
        # Weights too large to hold resident (e.g. v7x's 64 MiB VMEM):
        # tile the hidden dim and accumulate in f32 scratch.
        tile_h = _pick_tile_h(hid_p, in_p, out_p, w_item, weight_budget_bytes)

        def run(single_buffer):
            need = (act_bytes
                    + 2 * ((in_p + out_p) * tile_h * w_item + tile_h * b_item)
                    + (1 if single_buffer else 2) * out_p * b_item
                    + tile_b * out_p * 4)
            return _mlp_hidden_tiled(
                x_p, w1_p, b1_p, w2_p, b2_p,
                tile_b=tile_b, tile_h=tile_h,
                single_buffer_weights=single_buffer,
                vmem_limit=_clamp_vmem(need))

    try:
        out_padded = run(single_buffer=True)
    except Exception:
        # Conservative fallback if single-buffered (pl.Buffered(1)) specs are
        # rejected by this jax / Mosaic version; semantics are identical.
        out_padded = run(single_buffer=False)

    # Slice the padded slab back to the logical output.
    return out_padded[:batch, :out_dim]


def init_mlp_params(key, in_dim, hidden_dim, out_dim, dtype=jnp.float32):
    """Deterministic init matching nn.Linear's U(-1/sqrt(fan_in), 1/sqrt(fan_in)).
    Weights stored transposed vs PyTorch so the kernel computes x @ W + b."""
    k1, k2, k3, k4 = jax.random.split(key, 4)
    bound1 = 1.0 / jnp.sqrt(jnp.float32(in_dim))
    bound2 = 1.0 / jnp.sqrt(jnp.float32(hidden_dim))
    w1 = jax.random.uniform(k1, (in_dim, hidden_dim), dtype, -bound1, bound1)
    b1 = jax.random.uniform(k2, (1, hidden_dim), dtype, -bound1, bound1)
    w2 = jax.random.uniform(k3, (hidden_dim, out_dim), dtype, -bound2, bound2)
    b2 = jax.random.uniform(k4, (1, out_dim), dtype, -bound2, bound2)
    return w1, b1, w2, b2


if __name__ == "__main__":
    # --- Path 1: fully VMEM-resident weights (typical readout-MLP sizes) ----
    batch, in_dim, hidden_dim, out_dim = 8, 32, 64, 16
    key = jax.random.PRNGKey(0)
    kx, kp = jax.random.split(key)
    x = jax.random.normal(kx, (batch, in_dim), dtype=jnp.float32)
    w1, b1, w2, b2 = init_mlp_params(kp, in_dim, hidden_dim, out_dim)

    out = jax.block_until_ready(mlp_forward(x, w1, b1, w2, b2))
    ref = jnp.maximum(x @ w1 + b1, 0.0) @ w2 + b2
    assert out.shape == (batch, out_dim)
    assert jnp.allclose(out, ref, atol=1e-5, rtol=1e-5)

    # --- Path 2: hidden-dim-tiled accumulator path (forced via a tiny weight
    #     budget) with an odd batch to exercise padding / multi-tile batch ----
    batch2, hidden2 = 300, 256
    k1, k2 = jax.random.split(jax.random.PRNGKey(1))
    x2 = jax.random.normal(k1, (batch2, in_dim), dtype=jnp.float32)
    w1b, b1b, w2b, b2b = init_mlp_params(k2, in_dim, hidden2, out_dim)

    out2 = jax.block_until_ready(
        mlp_forward(x2, w1b, b1b, w2b, b2b, weight_budget_bytes=1))
    ref2 = jnp.maximum(x2 @ w1b + b1b, 0.0) @ w2b + b2b
    assert out2.shape == (batch2, out_dim)
    assert jnp.allclose(out2, ref2, atol=1e-4, rtol=1e-4)

    print("KERNEL_OK")
</pallas_src>

<mosaic_0001>
module attributes {stable_mosaic.version = 11 : i64} {
  func.func @_mlp_kernel_resident(%arg0: i32, %arg1: memref<8x128xf32, #tpu.memory_space<vmem>>, %arg2: memref<128x128xf32, #tpu.memory_space<vmem>>, %arg3: memref<1x128xf32, #tpu.memory_space<vmem>>, %arg4: memref<128x128xf32, #tpu.memory_space<vmem>>, %arg5: memref<1x128xf32, #tpu.memory_space<vmem>>, %arg6: memref<8x128xf32, #tpu.memory_space<vmem>>) attributes {dimension_semantics = [#tpu.dimension_semantics<parallel>], iteration_bounds = array<i64: 1>, scalar_prefetch = 0 : i64, scratch_operands = 0 : i64, tpu.core_type = #tpu.core_type<tc>, window_params = [{transform_indices = @transform_0, window_bounds = array<i64: 8, 128>}, {pipeline_mode = #tpu.pipeline_mode<synchronous>, transform_indices = @transform_1, window_bounds = array<i64: 128, 128>}, {pipeline_mode = #tpu.pipeline_mode<synchronous>, transform_indices = @transform_2, window_bounds = array<i64: 1, 128>}, {pipeline_mode = #tpu.pipeline_mode<synchronous>, transform_indices = @transform_3, window_bounds = array<i64: 128, 128>}, {pipeline_mode = #tpu.pipeline_mode<synchronous>, transform_indices = @transform_4, window_bounds = array<i64: 1, 128>}, {transform_indices = @transform_5, window_bounds = array<i64: 8, 128>}]} {
    %c0 = arith.constant 0 : index
    %c0_0 = arith.constant 0 : index
    %0 = vector.load %arg1[%c0, %c0_0] : memref<8x128xf32, #tpu.memory_space<vmem>>, vector<8x128xf32>
    %c0_1 = arith.constant 0 : index
    %c0_2 = arith.constant 0 : index
    %1 = vector.load %arg2[%c0_1, %c0_2] : memref<128x128xf32, #tpu.memory_space<vmem>>, vector<128x128xf32>
    %cst = arith.constant dense<0.000000e+00> : vector<8x128xf32>
    %2 = tpu.matmul %0, %1, %cst {dimension_numbers = #tpu.dot_dimension_numbers<[1], [0], [0], [1], [0, 0, 1, 1], [], []>} : vector<8x128xf32>, vector<128x128xf32>, vector<8x128xf32> -> vector<8x128xf32>
    %c0_3 = arith.constant 0 : index
    %c0_4 = arith.constant 0 : index
    %3 = vector.load %arg3[%c0_3, %c0_4] : memref<1x128xf32, #tpu.memory_space<vmem>>, vector<1x128xf32>
    %4 = vector.broadcast %3 : vector<1x128xf32> to vector<8x128xf32>
    %5 = arith.addf %2, %4 : vector<8x128xf32>
    %cst_5 = arith.constant 0.000000e+00 : f32
    %6 = vector.broadcast %cst_5 : f32 to vector<8x128xf32>
    %7 = arith.maximumf %5, %6 : vector<8x128xf32>
    %c0_6 = arith.constant 0 : index
    %c0_7 = arith.constant 0 : index
    %8 = vector.load %arg4[%c0_6, %c0_7] : memref<128x128xf32, #tpu.memory_space<vmem>>, vector<128x128xf32>
    %cst_8 = arith.constant dense<0.000000e+00> : vector<8x128xf32>
    %9 = tpu.matmul %7, %8, %cst_8 {dimension_numbers = #tpu.dot_dimension_numbers<[1], [0], [0], [1], [0, 0, 1, 1], [], []>} : vector<8x128xf32>, vector<128x128xf32>, vector<8x128xf32> -> vector<8x128xf32>
    %c0_9 = arith.constant 0 : index
    %c0_10 = arith.constant 0 : index
    %10 = vector.load %arg5[%c0_9, %c0_10] : memref<1x128xf32, #tpu.memory_space<vmem>>, vector<1x128xf32>
    %11 = vector.broadcast %10 : vector<1x128xf32> to vector<8x128xf32>
    %12 = arith.addf %9, %11 : vector<8x128xf32>
    %c0_11 = arith.constant 0 : index
    %c0_12 = arith.constant 0 : index
    %13 = vector.load %arg6[%c0_11, %c0_12] : memref<8x128xf32, #tpu.memory_space<vmem>>, vector<8x128xf32>
    tpu.vector_store %arg6[%c0_11, %c0_12], %12 {strides = array<i32>} : memref<8x128xf32, #tpu.memory_space<vmem>>, vector<8x128xf32>,
    return
  }
  func.func @transform_0(%arg0: i32) -> (i32, i32) {
    %c0_i32 = arith.constant 0 : i32
    %c0_i32_0 = arith.constant 0 : i32
    return %arg0, %c0_i32 : i32, i32
  }
  func.func @transform_1(%arg0: i32) -> (i32, i32) {
    %c0_i32 = arith.constant 0 : i32
    %c0_i32_0 = arith.constant 0 : i32
    %c0_i32_1 = arith.constant 0 : i32
    return %c0_i32, %c0_i32_0 : i32, i32
  }
  func.func @transform_2(%arg0: i32) -> (i32, i32) {
    %c0_i32 = arith.constant 0 : i32
    %c0_i32_0 = arith.constant 0 : i32
    %c0_i32_1 = arith.constant 0 : i32
    return %c0_i32, %c0_i32_0 : i32, i32
  }
  func.func @transform_3(%arg0: i32) -> (i32, i32) {
    %c0_i32 = arith.constant 0 : i32
    %c0_i32_0 = arith.constant 0 : i32
    %c0_i32_1 = arith.constant 0 : i32
    return %c0_i32, %c0_i32_0 : i32, i32
  }
  func.func @transform_4(%arg0: i32) -> (i32, i32) {
    %c0_i32 = arith.constant 0 : i32
    %c0_i32_0 = arith.constant 0 : i32
    %c0_i32_1 = arith.constant 0 : i32
    return %c0_i32, %c0_i32_0 : i32, i32
  }
  func.func @transform_5(%arg0: i32) -> (i32, i32) {
    %c0_i32 = arith.constant 0 : i32
    %c0_i32_0 = arith.constant 0 : i32
    return %arg0, %c0_i32 : i32, i32
  }
}

module attributes {stable_mosaic.version = 11 : i64} {
  func.func @_mlp_kernel_resident(%arg0: i32, %arg1: memref<8x128xf32, #tpu.memory_space<vmem>>, %arg2: memref<128x128xf32, #tpu.memory_space<vmem>>, %arg3: memref<1x128xf32, #tpu.memory_space<vmem>>, %arg4: memref<128x128xf32, #tpu.memory_space<vmem>>, %arg5: memref<1x128xf32, #tpu.memory_space<vmem>>, %arg6: memref<8x128xf32, #tpu.memory_space<vmem>>) attributes {dimension_semantics = [#tpu.dimension_semantics<parallel>], iteration_bounds = array<i64: 1>, scalar_prefetch = 0 : i64, scratch_operands = 0 : i64, tpu.core_type = #tpu.core_type<tc>, window_params = [{transform_indices = @transform_0, window_bounds = array<i64: 8, 128>}, {pipeline_mode = #tpu.pipeline_mode<synchronous>, transform_indices = @transform_1, window_bounds = array<i64: 128, 128>}, {pipeline_mode = #tpu.pipeline_mode<synchronous>, transform_indices = @transform_2, window_bounds = array<i64: 1, 128>}, {pipeline_mode = #tpu.pipeline_mode<synchronous>, transform_indices = @transform_3, window_bounds = array<i64: 128, 128>}, {pipeline_mode = #tpu.pipeline_mode<synchronous>, transform_indices = @transform_4, window_bounds = array<i64: 1, 128>}, {transform_indices = @transform_5, window_bounds = array<i64: 8, 128>}]} {
    %c0 = arith.constant 0 : index
    %c0_0 = arith.constant 0 : index
    %0 = vector.load %arg1[%c0, %c0_0] : memref<8x128xf32, #tpu.memory_space<vmem>>, vector<8x128xf32>
    %c0_1 = arith.constant 0 : index
    %c0_2 = arith.constant 0 : index
    %1 = vector.load %arg2[%c0_1, %c0_2] : memref<128x128xf32, #tpu.memory_space<vmem>>, vector<128x128xf32>
    %cst = arith.constant dense<0.000000e+00> : vector<8x128xf32>
    %2 = tpu.matmul %0, %1, %cst {dimension_numbers = #tpu.dot_dimension_numbers<[1], [0], [0], [1], [0, 0, 1, 1], [], []>} : vector<8x128xf32>, vector<128x128xf32>, vector<8x128xf32> -> vector<8x128xf32>
    %c0_3 = arith.constant 0 : index
    %c0_4 = arith.constant 0 : index
    %3 = vector.load %arg3[%c0_3, %c0_4] : memref<1x128xf32, #tpu.memory_space<vmem>>, vector<1x128xf32>
    %4 = vector.broadcast %3 : vector<1x128xf32> to vector<8x128xf32>
    %5 = arith.addf %2, %4 : vector<8x128xf32>
    %cst_5 = arith.constant 0.000000e+00 : f32
    %6 = vector.broadcast %cst_5 : f32 to vector<8x128xf32>
    %7 = arith.maximumf %5, %6 : vector<8x128xf32>
    %c0_6 = arith.constant 0 : index
    %c0_7 = arith.constant 0 : index
    %8 = vector.load %arg4[%c0_6, %c0_7] : memref<128x128xf32, #tpu.memory_space<vmem>>, vector<128x128xf32>
    %cst_8 = arith.constant dense<0.000000e+00> : vector<8x128xf32>
    %9 = tpu.matmul %7, %8, %cst_8 {dimension_numbers = #tpu.dot_dimension_numbers<[1], [0], [0], [1], [0, 0, 1, 1], [], []>} : vector<8x128xf32>, vector<128x128xf32>, vector<8x128xf32> -> vector<8x128xf32>
    %c0_9 = arith.constant 0 : index
    %c0_10 = arith.constant 0 : index
    %10 = vector.load %arg5[%c0_9, %c0_10] : memref<1x128xf32, #tpu.memory_space<vmem>>, vector<1x128xf32>
    %11 = vector.broadcast %10 : vector<1x128xf32> to vector<8x128xf32>
    %12 = arith.addf %9, %11 : vector<8x128xf32>
    %c0_11 = arith.constant 0 : index
    %c0_12 = arith.constant 0 : index
    %13 = vector.load %arg6[%c0_11, %c0_12] : memref<8x128xf32, #tpu.memory_space<vmem>>, vector<8x128xf32>
    tpu.vector_store %arg6[%c0_11, %c0_12], %12 {strides = array<i32>} : memref<8x128xf32, #tpu.memory_space<vmem>>, vector<8x128xf32>,
    return
  }
  func.func @transform_0(%arg0: i32) -> (i32, i32) {
    %c0_i32 = arith.constant 0 : i32
    %c0_i32_0 = arith.constant 0 : i32
    return %arg0, %c0_i32 : i32, i32
  }
  func.func @transform_1(%arg0: i32) -> (i32, i32) {
    %c0_i32 = arith.constant 0 : i32
    %c0_i32_0 = arith.constant 0 : i32
    %c0_i32_1 = arith.constant 0 : i32
    return %c0_i32, %c0_i32_0 : i32, i32
  }
  func.func @transform_2(%arg0: i32) -> (i32, i32) {
    %c0_i32 = arith.constant 0 : i32
    %c0_i32_0 = arith.constant 0 : i32
    %c0_i32_1 = arith.constant 0 : i32
    return %c0_i32, %c0_i32_0 : i32, i32
  }
  func.func @transform_3(%arg0: i32) -> (i32, i32) {
    %c0_i32 = arith.constant 0 : i32
    %c0_i32_0 = arith.constant 0 : i32
    %c0_i32_1 = arith.constant 0 : i32
    return %c0_i32, %c0_i32_0 : i32, i32
  }
  func.func @transform_4(%arg0: i32) -> (i32, i32) {
    %c0_i32 = arith.constant 0 : i32
    %c0_i32_0 = arith.constant 0 : i32
    %c0_i32_1 = arith.constant 0 : i32
    return %c0_i32, %c0_i32_0 : i32, i32
  }
  func.func @transform_5(%arg0: i32) -> (i32, i32) {
    %c0_i32 = arith.constant 0 : i32
    %c0_i32_0 = arith.constant 0 : i32
    return %arg0, %c0_i32 : i32, i32
  }
}

</mosaic_0001>

<llo_original>
// kernel: _mlp_resident.1
$region0: #{_mlp_resident.1}
  #allocation0 [shape = 'u32[]', space=smem, size = 0x4, offset = 0x4, fixed_abs, tag = 'smem constant byte address 0x4 - core index']
  #allocation1 [shape = 'u32[144,128]{1,0:T(1,128)}', space=vmem, size = 0x12000, scoped, tag = 'internal scratch']
  %s0 = inlined_call_operand.hbm [shape: f32[8,128], index: 0, kind: input, shape index: {}]
  %s1 = inlined_call_operand.hbm [shape: f32[128,128], index: 1, kind: input, shape index: {}]
  %s2 = inlined_call_operand.vmem [shape: f32[1,128], index: 2, kind: input, shape index: {}]
  %s3 = inlined_call_operand.hbm [shape: f32[128,128], index: 3, kind: input, shape index: {}]
  %s4 = inlined_call_operand.vmem [shape: f32[1,128], index: 4, kind: input, shape index: {}]
  %s5 = inlined_call_operand.hbm [shape: f32[8,128], index: 5, kind: output, shape index: {}]
  %s6 = sld [smem:[#allocation0]]
  $region42: #{_mlp_resident.1} parent=0
    _
  %s8 = ssub.s32 1, %s6
  %s9 = scalar_select 0, %s8, %s6
  $region1: #{_mlp_resident.1} parent=0
    #allocation2 [shape = 'u8[4096]{0}', space=vmem, size = 0x1000, scoped, tag = 'input window, operand 0, single buffered']
    #allocation3 [shape = 's32[1]{0}', space=sflag, size = 0x4, scoped, tag = 'scoped memory for _mlp_resident.1']
    #allocation4 [shape = 's32[1]{0}', space=sflag, size = 0x4, scoped, tag = 'scoped memory for _mlp_resident.1']
    #allocation5 [shape = 'u8[65536]{0}', space=vmem, size = 0x10000, scoped, tag = 'input window, operand 1, single buffered']
    #allocation6 [shape = 's32[1]{0}', space=sflag, size = 0x4, scoped, tag = 'scoped memory for _mlp_resident.1']
    #allocation7 [shape = 'u8[65536]{0}', space=vmem, size = 0x10000, scoped, tag = 'input window, operand 3, single buffered']
    #allocation8 [shape = 'u8[4096]{0}', space=vmem, size = 0x1000, scoped, tag = 'output window, operand 0, single buffered']
    %10 = vsyncpa [#allocation3], 0
    %11 = vsyncpa [#allocation6], 0
    %12 = vsyncpa [#allocation4], 0
    // Predicated region
    $region2: #{_mlp_resident.1} parent=1 // pred_check
      _
    $region3: #{_mlp_resident.1} parent=1 // pred_check_branch
      %14 = sbr.rel (0) target = $region5
    $region4: #{_mlp_resident.1} parent=1 // pred_region
      %s16 = ssub.s32 128, 128
      %17 = vsyncadd [#allocation3], %s16
      %s19 = sshll.u32 [#allocation2], 4
      %s20 = int_to_ptr.vmem [resolvable:$true] %s19
      %22 = dma.hbm_to_vmem [thread:$0]  %s0, 128, %s20, [#allocation3]
    $region5: #{_mlp_resident.1} parent=1 // pred_fallthru
      _
    // Predicated region
    $region6: #{_mlp_resident.1} parent=1 // pred_check
      _
    $region7: #{_mlp_resident.1} parent=1 // pred_check_branch
      %24 = sbr.rel (0) target = $region9
    $region8: #{_mlp_resident.1} parent=1 // pred_region
      %s26 = ssub.s32 2048, 2048
      %27 = vsyncadd [#allocation6], %s26
      %s28 = sshll.u32 [#allocation5], 4
      %s29 = int_to_ptr.vmem [resolvable:$true] %s28
      %34 = dma.hbm_to_vmem [thread:$0]  %s1, 2048, %s29, [#allocation6], 128, 128, 8
    $region9: #{_mlp_resident.1} parent=1 // pred_fallthru
      _
    // Predicated region
    $region10: #{_mlp_resident.1} parent=1 // pred_check
      _
    $region11: #{_mlp_resident.1} parent=1 // pred_check_branch
      %36 = sbr.rel (0) target = $region13
    $region12: #{_mlp_resident.1} parent=1 // pred_region
      _
    $region13: #{_mlp_resident.1} parent=1 // pred_fallthru
      _
    // Predicated region
    $region14: #{_mlp_resident.1} parent=1 // pred_check
      _
    $region15: #{_mlp_resident.1} parent=1 // pred_check_branch
      %38 = sbr.rel (0) target = $region17
    $region16: #{_mlp_resident.1} parent=1 // pred_region
      %s40 = ssub.s32 2048, 2048
      %41 = vsyncadd [#allocation6], %s40
      %s42 = sshll.u32 [#allocation7], 4
      %s43 = int_to_ptr.vmem [resolvable:$true] %s42
      %48 = dma.hbm_to_vmem [thread:$0]  %s3, 2048, %s43, [#allocation6], 128, 128, 8
    $region17: #{_mlp_resident.1} parent=1 // pred_fallthru
      _
    // Predicated region
    $region18: #{_mlp_resident.1} parent=1 // pred_check
      _
    $region19: #{_mlp_resident.1} parent=1 // pred_check_branch
      %50 = sbr.rel (0) target = $region21
    $region20: #{_mlp_resident.1} parent=1 // pred_region
      _
    $region21: #{_mlp_resident.1} parent=1 // pred_fallthru
      _
    // Predicated region
    $region22: #{_mlp_resident.1} parent=1 // pred_check
      _
    $region23: #{_mlp_resident.1} parent=1 // pred_check_branch
      %52 = sbr.rel (0) target = $region25
    $region24: #{_mlp_resident.1} parent=1 // pred_region
      %53 = dma.done [#allocation3], 128
    $region25: #{_mlp_resident.1} parent=1 // pred_fallthru
      _
    // Predicated region
    $region26: #{_mlp_resident.1} parent=1 // pred_check
      _
    $region27: #{_mlp_resident.1} parent=1 // pred_check_branch
      %55 = sbr.rel (0) target = $region29
    $region28: #{_mlp_resident.1} parent=1 // pred_region
      %56 = dma.done [#allocation6], 2048
    $region29: #{_mlp_resident.1} parent=1 // pred_fallthru
      _
    // Predicated region
    $region30: #{_mlp_resident.1} parent=1 // pred_check
      _
    $region31: #{_mlp_resident.1} parent=1 // pred_check_branch
      %58 = sbr.rel (0) target = $region33
    $region32: #{_mlp_resident.1} parent=1 // pred_region
      %59 = dma.done [#allocation6], 2048
    $region33: #{_mlp_resident.1} parent=1 // pred_fallthru
      _
    %v60 = vld [vmem:[#allocation2] sm:$0xff]
    %v61 = vld [vmem:[#allocation5] sm:$0xff]
    %v62 = vld [vmem:[#allocation5 + $0x8] sm:$0xff]
    %v63 = vld [vmem:[#allocation5 + $0x10] sm:$0xff]
    %v64 = vld [vmem:[#allocation5 + $0x18] sm:$0xff]
    %v65 = vld [vmem:[#allocation5 + $0x20] sm:$0xff]
    %v66 = vld [vmem:[#allocation5 + $0x28] sm:$0xff]
    %v67 = vld [vmem:[#allocation5 + $0x30] sm:$0xff]
    %v68 = vld [vmem:[#allocation5 + $0x38] sm:$0xff]
    %v69 = vld [vmem:[#allocation5 + $0x40] sm:$0xff]
    %v70 = vld [vmem:[#allocation5 + $0x48] sm:$0xff]
    %v71 = vld [vmem:[#allocation5 + $0x50] sm:$0xff]
    %v72 = vld [vmem:[#allocation5 + $0x58] sm:$0xff]
    %v73 = vld [vmem:[#allocation5 + $0x60] sm:$0xff]
    %v74 = vld [vmem:[#allocation5 + $0x68] sm:$0xff]
    %v75 = vld [vmem:[#allocation5 + $0x70] sm:$0xff]
    %v76 = vld [vmem:[#allocation5 + $0x78] sm:$0xff]
    %v77 = vld [vmem:[%s2] sm:$0x1]
    %v79 = vlaneseq
    %v80 = vshrl.u32 %v79, 7
    %v81 = vsub.s32 0, %v80
    %v82 = vrot.slane %v77, %v81
    %84 = vmatprep.subr.mxu0 0.0
    %85 = vmatpush1.msra.mxu0 %v61
    %86 = vmatprep.subr.mxu0 0.0
    %87 = vmatpush1.msra.mxu0 %v62
    %88 = vmatprep.subr.mxu0 0.0
    %89 = vmatpush1.msra.mxu0 %v63
    %90 = vmatprep.subr.mxu0 0.0
    %91 = vmatpush1.msra.mxu0 %v64
    %92 = vmatprep.subr.mxu0 0.0
    %93 = vmatpush1.msra.mxu0 %v65
    %94 = vmatprep.subr.mxu0 0.0
    %95 = vmatpush1.msra.mxu0 %v66
    %96 = vmatprep.subr.mxu0 0.0
    %97 = vmatpush1.msra.mxu0 %v67
    %98 = vmatprep.subr.mxu0 0.0
    %99 = vmatpush1.msra.mxu0 %v68
    %100 = vmatprep.subr.mxu0 0.0
    %101 = vmatpush1.msra.mxu0 %v69
    %102 = vmatprep.subr.mxu0 0.0
    %103 = vmatpush1.msra.mxu0 %v70
    %104 = vmatprep.subr.mxu0 0.0
    %105 = vmatpush1.msra.mxu0 %v71
    %106 = vmatprep.subr.mxu0 0.0
    %107 = vmatpush1.msra.mxu0 %v72
    %108 = vmatprep.subr.mxu0 0.0
    %109 = vmatpush1.msra.mxu0 %v73
    %110 = vmatprep.subr.mxu0 0.0
    %111 = vmatpush1.msra.mxu0 %v74
    %112 = vmatprep.subr.mxu0 0.0
    %113 = vmatpush1.msra.mxu0 %v75
    %114 = vmatprep.subr.mxu0 0.0
    %115 = vmatpush1.msra.mxu0 %v76
    %116 = vmatprep.subr.mxu0 0.0
    %117 = vmatpush1.msra.mxu0 0.0
    %118 = vmatprep.subr.mxu0 0.0
    %119 = vmatpush1.msra.mxu0 0.0
    %120 = vmatprep.subr.mxu0 0.0
    %121 = vmatpush1.msra.mxu0 0.0
    %122 = vmatprep.subr.mxu0 0.0
    %123 = vmatpush1.msra.mxu0 0.0
    %124 = vmatprep.subr.mxu0 0.0
    %125 = vmatpush1.msra.mxu0 0.0
    %126 = vmatprep.subr.mxu0 0.0
    %127 = vmatpush1.msra.mxu0 0.0
    %128 = vmatprep.subr.mxu0 0.0
    %129 = vmatpush1.msra.mxu0 0.0
    %130 = vmatprep.subr.mxu0 0.0
    %131 = vmatpush1.msra.mxu0 0.0
    %132 = vmatprep.subr.mxu0 0.0
    %133 = vmatpush1.msra.mxu0 0.0
    %134 = vmatprep.subr.mxu0 0.0
    %135 = vmatpush1.msra.mxu0 0.0
    %136 = vmatprep.subr.mxu0 0.0
    %137 = vmatpush1.msra.mxu0 0.0
    %138 = vmatprep.subr.mxu0 0.0
    %139 = vmatpush1.msra.mxu0 0.0
    %140 = vmatprep.subr.mxu0 0.0
    %141 = vmatpush1.msra.mxu0 0.0
    %142 = vmatprep.subr.mxu0 0.0
    %143 = vmatpush1.msra.mxu0 0.0
    %144 = vmatprep.subr.mxu0 0.0
    %145 = vmatpush1.msra.mxu0 0.0
    %146 = vmatprep.subr.mxu0 0.0
    %147 = vmatpush1.msra.mxu0 0.0
    %148 = vmatprep.mubr.f32.mxu0 0.0
    %149 = vmatmul.mubr.f32.gmra.mrb[0].mxu0 %v60
    %v150 = vpop.f32.mrb[0].mxu0
    %v151 = vadd.f32 %v82, %v150
    %v152 = vpop.f32.mrb[0].mxu0
    %153 = vdwg.mxu0
    %v154 = vmax.f32 %v151, 0.0
    %v155 = vld [vmem:[#allocation7] sm:$0xff]
    %v156 = vld [vmem:[#allocation7 + $0x8] sm:$0xff]
    %v157 = vld [vmem:[#allocation7 + $0x10] sm:$0xff]
    %v158 = vld [vmem:[#allocation7 + $0x18] sm:$0xff]
    %v159 = vld [vmem:[#allocation7 + $0x20] sm:$0xff]
    %v160 = vld [vmem:[#allocation7 + $0x28] sm:$0xff]
    %v161 = vld [vmem:[#allocation7 + $0x30] sm:$0xff]
    %v162 = vld [vmem:[#allocation7 + $0x38] sm:$0xff]
    %v163 = vld [vmem:[#allocation7 + $0x40] sm:$0xff]
    %v164 = vld [vmem:[#allocation7 + $0x48] sm:$0xff]
    %v165 = vld [vmem:[#allocation7 + $0x50] sm:$0xff]
    %v166 = vld [vmem:[#allocation7 + $0x58] sm:$0xff]
    %v167 = vld [vmem:[#allocation7 + $0x60] sm:$0xff]
    %v168 = vld [vmem:[#allocation7 + $0x68] sm:$0xff]
    %v169 = vld [vmem:[#allocation7 + $0x70] sm:$0xff]
    %v170 = vld [vmem:[#allocation7 + $0x78] sm:$0xff]
    %v171 = vld [vmem:[%s4] sm:$0x1]
    %v173 = vlaneseq
    %v174 = vshrl.u32 %v173, 7
    %v175 = vsub.s32 0, %v174
    %v176 = vrot.slane %v171, %v175
    %178 = vmatprep.subr.mxu0 0.0
    %179 = vmatpush1.msra.mxu0 %v155
    %180 = vmatprep.subr.mxu0 0.0
    %181 = vmatpush1.msra.mxu0 %v156
    %182 = vmatprep.subr.mxu0 0.0
    %183 = vmatpush1.msra.mxu0 %v157
    %184 = vmatprep.subr.mxu0 0.0
    %185 = vmatpush1.msra.mxu0 %v158
    %186 = vmatprep.subr.mxu0 0.0
    %187 = vmatpush1.msra.mxu0 %v159
    %188 = vmatprep.subr.mxu0 0.0
    %189 = vmatpush1.msra.mxu0 %v160
    %190 = vmatprep.subr.mxu0 0.0
    %191 = vmatpush1.msra.mxu0 %v161
    %192 = vmatprep.subr.mxu0 0.0
    %193 = vmatpush1.msra.mxu0 %v162
    %194 = vmatprep.subr.mxu0 0.0
    %195 = vmatpush1.msra.mxu0 %v163
    %196 = vmatprep.subr.mxu0 0.0
    %197 = vmatpush1.msra.mxu0 %v164
    %198 = vmatprep.subr.mxu0 0.0
    %199 = vmatpush1.msra.mxu0 %v165
    %200 = vmatprep.subr.mxu0 0.0
    %201 = vmatpush1.msra.mxu0 %v166
    %202 = vmatprep.subr.mxu0 0.0
    %203 = vmatpush1.msra.mxu0 %v167
    %204 = vmatprep.subr.mxu0 0.0
    %205 = vmatpush1.msra.mxu0 %v168
    %206 = vmatprep.subr.mxu0 0.0
    %207 = vmatpush1.msra.mxu0 %v169
    %208 = vmatprep.subr.mxu0 0.0
    %209 = vmatpush1.msra.mxu0 %v170
    %210 = vmatprep.subr.mxu0 0.0
    %211 = vmatpush1.msra.mxu0 0.0
    %212 = vmatprep.subr.mxu0 0.0
    %213 = vmatpush1.msra.mxu0 0.0
    %214 = vmatprep.subr.mxu0 0.0
    %215 = vmatpush1.msra.mxu0 0.0
    %216 = vmatprep.subr.mxu0 0.0
    %217 = vmatpush1.msra.mxu0 0.0
    %218 = vmatprep.subr.mxu0 0.0
    %219 = vmatpush1.msra.mxu0 0.0
    %220 = vmatprep.subr.mxu0 0.0
    %221 = vmatpush1.msra.mxu0 0.0
    %222 = vmatprep.subr.mxu0 0.0
    %223 = vmatpush1.msra.mxu0 0.0
    %224 = vmatprep.subr.mxu0 0.0
    %225 = vmatpush1.msra.mxu0 0.0
    %226 = vmatprep.subr.mxu0 0.0
    %227 = vmatpush1.msra.mxu0 0.0
    %228 = vmatprep.subr.mxu0 0.0
    %229 = vmatpush1.msra.mxu0 0.0
    %230 = vmatprep.subr.mxu0 0.0
    %231 = vmatpush1.msra.mxu0 0.0
    %232 = vmatprep.subr.mxu0 0.0
    %233 = vmatpush1.msra.mxu0 0.0
    %234 = vmatprep.subr.mxu0 0.0
    %235 = vmatpush1.msra.mxu0 0.0
    %236 = vmatprep.subr.mxu0 0.0
    %237 = vmatpush1.msra.mxu0 0.0
    %238 = vmatprep.subr.mxu0 0.0
    %239 = vmatpush1.msra.mxu0 0.0
    %240 = vmatprep.subr.mxu0 0.0
    %241 = vmatpush1.msra.mxu0 0.0
    %242 = vmatprep.mubr.f32.mxu0 0.0
    %243 = vmatmul.mubr.f32.gmra.mrb[0].mxu0 %v154
    %v244 = vpop.f32.mrb[0].mxu0
    %v245 = vadd.f32 %v176, %v244
    %v246 = vpop.f32.mrb[0].mxu0
    %247 = vdwg.mxu0
    %248 = vst [vmem:[#allocation8] sm:$0xff] %v245
    // Predicated region
    $region34: #{_mlp_resident.1} parent=1 // pred_check
      _
    $region35: #{_mlp_resident.1} parent=1 // pred_check_branch
      %250 = sbr.rel (0) target = $region37
    $region36: #{_mlp_resident.1} parent=1 // pred_region
      %s252 = ssub.s32 128, 128
      %253 = vsyncadd [#allocation4], %s252
      %s255 = sshll.u32 [#allocation8], 4
      %s256 = int_to_ptr.vmem [resolvable:$true] %s255
      %258 = dma.vmem_to_hbm [thread:$0]  %s256, 128, %s5, [#allocation4]
    $region37: #{_mlp_resident.1} parent=1 // pred_fallthru
      _
    // Predicated region
    $region38: #{_mlp_resident.1} parent=1 // pred_check
      _
    $region39: #{_mlp_resident.1} parent=1 // pred_check_branch
      %260 = sbr.rel (0) target = $region41
    $region40: #{_mlp_resident.1} parent=1 // pred_region
      %261 = dma.done [#allocation4], 128
    $region41: #{_mlp_resident.1} parent=1 // pred_fallthru
      _
    %262 = vsyncpa [#allocation3], 1
    %263 = vsyncpa [#allocation6], 1
    %264 = vsyncpa [#allocation4], 1

// kernel: _mlp_resident.1
$region0: #{_mlp_resident.1}
  #allocation0 [shape = 'u32[]', space=smem, size = 0x4, offset = 0x4, fixed_abs, tag = 'smem constant byte address 0x4 - core index']
  #allocation1 [shape = 'u32[144,128]{1,0:T(1,128)}', space=vmem, size = 0x12000, scoped, tag = 'internal scratch']
  %s0 = inlined_call_operand.hbm [shape: f32[8,128], index: 0, kind: input, shape index: {}]
  %s1 = inlined_call_operand.hbm [shape: f32[128,128], index: 1, kind: input, shape index: {}]
  %s2 = inlined_call_operand.vmem [shape: f32[1,128], index: 2, kind: input, shape index: {}]
  %s3 = inlined_call_operand.hbm [shape: f32[128,128], index: 3, kind: input, shape index: {}]
  %s4 = inlined_call_operand.vmem [shape: f32[1,128], index: 4, kind: input, shape index: {}]
  %s5 = inlined_call_operand.hbm [shape: f32[8,128], index: 5, kind: output, shape index: {}]
  %s6 = sld [smem:[#allocation0]]
  $region42: #{_mlp_resident.1} parent=0
    _
  %s8 = ssub.s32 1, %s6
  %s9 = scalar_select 0, %s8, %s6
  $region1: #{_mlp_resident.1} parent=0
    #allocation2 [shape = 'u8[4096]{0}', space=vmem, size = 0x1000, scoped, tag = 'input window, operand 0, single buffered']
    #allocation3 [shape = 's32[1]{0}', space=sflag, size = 0x4, scoped, tag = 'scoped memory for _mlp_resident.1']
    #allocation4 [shape = 's32[1]{0}', space=sflag, size = 0x4, scoped, tag = 'scoped memory for _mlp_resident.1']
    #allocation5 [shape = 'u8[65536]{0}', space=vmem, size = 0x10000, scoped, tag = 'input window, operand 1, single buffered']
    #allocation6 [shape = 's32[1]{0}', space=sflag, size = 0x4, scoped, tag = 'scoped memory for _mlp_resident.1']
    #allocation7 [shape = 'u8[65536]{0}', space=vmem, size = 0x10000, scoped, tag = 'input window, operand 3, single buffered']
    #allocation8 [shape = 'u8[4096]{0}', space=vmem, size = 0x1000, scoped, tag = 'output window, operand 0, single buffered']
    %10 = vsyncpa [#allocation3], 0
    %11 = vsyncpa [#allocation6], 0
    %12 = vsyncpa [#allocation4], 0
    // Predicated region
    $region2: #{_mlp_resident.1} parent=1 // pred_check
      _
    $region3: #{_mlp_resident.1} parent=1 // pred_check_branch
      %14 = sbr.rel (0) target = $region5
    $region4: #{_mlp_resident.1} parent=1 // pred_region
      %s16 = ssub.s32 128, 128
      %17 = vsyncadd [#allocation3], %s16
      %s19 = sshll.u32 [#allocation2], 4
      %s20 = int_to_ptr.vmem [resolvable:$true] %s19
      %22 = dma.hbm_to_vmem [thread:$0]  %s0, 128, %s20, [#allocation3]
    $region5: #{_mlp_resident.1} parent=1 // pred_fallthru
      _
    // Predicated region
    $region6: #{_mlp_resident.1} parent=1 // pred_check
      _
    $region7: #{_mlp_resident.1} parent=1 // pred_check_branch
      %24 = sbr.rel (0) target = $region9
    $region8: #{_mlp_resident.1} parent=1 // pred_region
      %s26 = ssub.s32 2048, 2048
      %27 = vsyncadd [#allocation6], %s26
      %s28 = sshll.u32 [#allocation5], 4
      %s29 = int_to_ptr.vmem [resolvable:$true] %s28
      %34 = dma.hbm_to_vmem [thread:$0]  %s1, 2048, %s29, [#allocation6], 128, 128, 8
    $region9: #{_mlp_resident.1} parent=1 // pred_fallthru
      _
    // Predicated region
    $region10: #{_mlp_resident.1} parent=1 // pred_check
      _
    $region11: #{_mlp_resident.1} parent=1 // pred_check_branch
      %36 = sbr.rel (0) target = $region13
    $region12: #{_mlp_resident.1} parent=1 // pred_region
      _
    $region13: #{_mlp_resident.1} parent=1 // pred_fallthru
      _
    // Predicated region
    $region14: #{_mlp_resident.1} parent=1 // pred_check
      _
    $region15: #{_mlp_resident.1} parent=1 // pred_check_branch
      %38 = sbr.rel (0) target = $region17
    $region16: #{_mlp_resident.1} parent=1 // pred_region
      %s40 = ssub.s32 2048, 2048
      %41 = vsyncadd [#allocation6], %s40
      %s42 = sshll.u32 [#allocation7], 4
      %s43 = int_to_ptr.vmem [resolvable:$true] %s42
      %48 = dma.hbm_to_vmem [thread:$0]  %s3, 2048, %s43, [#allocation6], 128, 128, 8
    $region17: #{_mlp_resident.1} parent=1 // pred_fallthru
      _
    // Predicated region
    $region18: #{_mlp_resident.1} parent=1 // pred_check
      _
    $region19: #{_mlp_resident.1} parent=1 // pred_check_branch
      %50 = sbr.rel (0) target = $region21
    $region20: #{_mlp_resident.1} parent=1 // pred_region
      _
    $region21: #{_mlp_resident.1} parent=1 // pred_fallthru
      _
    // Predicated region
    $region22: #{_mlp_resident.1} parent=1 // pred_check
      _
    $region23: #{_mlp_resident.1} parent=1 // pred_check_branch
      %52 = sbr.rel (0) target = $region25
    $region24: #{_mlp_resident.1} parent=1 // pred_region
      %53 = dma.done [#allocation3], 128
    $region25: #{_mlp_resident.1} parent=1 // pred_fallthru
      _
    // Predicated region
    $region26: #{_mlp_resident.1} parent=1 // pred_check
      _
    $region27: #{_mlp_resident.1} parent=1 // pred_check_branch
      %55 = sbr.rel (0) target = $region29
    $region28: #{_mlp_resident.1} parent=1 // pred_region
      %56 = dma.done [#allocation6], 2048
    $region29: #{_mlp_resident.1} parent=1 // pred_fallthru
      _
    // Predicated region
    $region30: #{_mlp_resident.1} parent=1 // pred_check
      _
    $region31: #{_mlp_resident.1} parent=1 // pred_check_branch
      %58 = sbr.rel (0) target = $region33
    $region32: #{_mlp_resident.1} parent=1 // pred_region
      %59 = dma.done [#allocation6], 2048
    $region33: #{_mlp_resident.1} parent=1 // pred_fallthru
      _
    %v60 = vld [vmem:[#allocation2] sm:$0xff]
    %v61 = vld [vmem:[#allocation5] sm:$0xff]
    %v62 = vld [vmem:[#allocation5 + $0x8] sm:$0xff]
    %v63 = vld [vmem:[#allocation5 + $0x10] sm:$0xff]
    %v64 = vld [vmem:[#allocation5 + $0x18] sm:$0xff]
    %v65 = vld [vmem:[#allocation5 + $0x20] sm:$0xff]
    %v66 = vld [vmem:[#allocation5 + $0x28] sm:$0xff]
    %v67 = vld [vmem:[#allocation5 + $0x30] sm:$0xff]
    %v68 = vld [vmem:[#allocation5 + $0x38] sm:$0xff]
    %v69 = vld [vmem:[#allocation5 + $0x40] sm:$0xff]
    %v70 = vld [vmem:[#allocation5 + $0x48] sm:$0xff]
    %v71 = vld [vmem:[#allocation5 + $0x50] sm:$0xff]
    %v72 = vld [vmem:[#allocation5 + $0x58] sm:$0xff]
    %v73 = vld [vmem:[#allocation5 + $0x60] sm:$0xff]
    %v74 = vld [vmem:[#allocation5 + $0x68] sm:$0xff]
    %v75 = vld [vmem:[#allocation5 + $0x70] sm:$0xff]
    %v76 = vld [vmem:[#allocation5 + $0x78] sm:$0xff]
    %v77 = vld [vmem:[%s2] sm:$0x1]
    %v79 = vlaneseq
    %v80 = vshrl.u32 %v79, 7
    %v81 = vsub.s32 0, %v80
    %v82 = vrot.slane %v77, %v81
    %84 = vmatprep.subr.mxu0 0.0
    %85 = vmatpush1.msra.mxu0 %v61
    %86 = vmatprep.subr.mxu0 0.0
    %87 = vmatpush1.msra.mxu0 %v62
    %88 = vmatprep.subr.mxu0 0.0
    %89 = vmatpush1.msra.mxu0 %v63
    %90 = vmatprep.subr.mxu0 0.0
    %91 = vmatpush1.msra.mxu0 %v64
    %92 = vmatprep.subr.mxu0 0.0
    %93 = vmatpush1.msra.mxu0 %v65
    %94 = vmatprep.subr.mxu0 0.0
    %95 = vmatpush1.msra.mxu0 %v66
    %96 = vmatprep.subr.mxu0 0.0
    %97 = vmatpush1.msra.mxu0 %v67
    %98 = vmatprep.subr.mxu0 0.0
    %99 = vmatpush1.msra.mxu0 %v68
    %100 = vmatprep.subr.mxu0 0.0
    %101 = vmatpush1.msra.mxu0 %v69
    %102 = vmatprep.subr.mxu0 0.0
    %103 = vmatpush1.msra.mxu0 %v70
    %104 = vmatprep.subr.mxu0 0.0
    %105 = vmatpush1.msra.mxu0 %v71
    %106 = vmatprep.subr.mxu0 0.0
    %107 = vmatpush1.msra.mxu0 %v72
    %108 = vmatprep.subr.mxu0 0.0
    %109 = vmatpush1.msra.mxu0 %v73
    %110 = vmatprep.subr.mxu0 0.0
    %111 = vmatpush1.msra.mxu0 %v74
    %112 = vmatprep.subr.mxu0 0.0
    %113 = vmatpush1.msra.mxu0 %v75
    %114 = vmatprep.subr.mxu0 0.0
    %115 = vmatpush1.msra.mxu0 %v76
    %116 = vmatprep.subr.mxu0 0.0
    %117 = vmatpush1.msra.mxu0 0.0
    %118 = vmatprep.subr.mxu0 0.0
    %119 = vmatpush1.msra.mxu0 0.0
    %120 = vmatprep.subr.mxu0 0.0
    %121 = vmatpush1.msra.mxu0 0.0
    %122 = vmatprep.subr.mxu0 0.0
    %123 = vmatpush1.msra.mxu0 0.0
    %124 = vmatprep.subr.mxu0 0.0
    %125 = vmatpush1.msra.mxu0 0.0
    %126 = vmatprep.subr.mxu0 0.0
    %127 = vmatpush1.msra.mxu0 0.0
    %128 = vmatprep.subr.mxu0 0.0
    %129 = vmatpush1.msra.mxu0 0.0
    %130 = vmatprep.subr.mxu0 0.0
    %131 = vmatpush1.msra.mxu0 0.0
    %132 = vmatprep.subr.mxu0 0.0
    %133 = vmatpush1.msra.mxu0 0.0
    %134 = vmatprep.subr.mxu0 0.0
    %135 = vmatpush1.msra.mxu0 0.0
    %136 = vmatprep.subr.mxu0 0.0
    %137 = vmatpush1.msra.mxu0 0.0
    %138 = vmatprep.subr.mxu0 0.0
    %139 = vmatpush1.msra.mxu0 0.0
    %140 = vmatprep.subr.mxu0 0.0
    %141 = vmatpush1.msra.mxu0 0.0
    %142 = vmatprep.subr.mxu0 0.0
    %143 = vmatpush1.msra.mxu0 0.0
    %144 = vmatprep.subr.mxu0 0.0
    %145 = vmatpush1.msra.mxu0 0.0
    %146 = vmatprep.subr.mxu0 0.0
    %147 = vmatpush1.msra.mxu0 0.0
    %148 = vmatprep.mubr.f32.mxu0 0.0
    %149 = vmatmul.mubr.f32.gmra.mrb[0].mxu0 %v60
    %v150 = vpop.f32.mrb[0].mxu0
    %v151 = vadd.f32 %v82, %v150
    %v152 = vpop.f32.mrb[0].mxu0
    %153 = vdwg.mxu0
    %v154 = vmax.f32 %v151, 0.0
    %v155 = vld [vmem:[#allocation7] sm:$0xff]
    %v156 = vld [vmem:[#allocation7 + $0x8] sm:$0xff]
    %v157 = vld [vmem:[#allocation7 + $0x10] sm:$0xff]
    %v158 = vld [vmem:[#allocation7 + $0x18] sm:$0xff]
    %v159 = vld [vmem:[#allocation7 + $0x20] sm:$0xff]
    %v160 = vld [vmem:[#allocation7 + $0x28] sm:$0xff]
    %v161 = vld [vmem:[#allocation7 + $0x30] sm:$0xff]
    %v162 = vld [vmem:[#allocation7 + $0x38] sm:$0xff]
    %v163 = vld [vmem:[#allocation7 + $0x40] sm:$0xff]
    %v164 = vld [vmem:[#allocation7 + $0x48] sm:$0xff]
    %v165 = vld [vmem:[#allocation7 + $0x50] sm:$0xff]
    %v166 = vld [vmem:[#allocation7 + $0x58] sm:$0xff]
    %v167 = vld [vmem:[#allocation7 + $0x60] sm:$0xff]
    %v168 = vld [vmem:[#allocation7 + $0x68] sm:$0xff]
    %v169 = vld [vmem:[#allocation7 + $0x70] sm:$0xff]
    %v170 = vld [vmem:[#allocation7 + $0x78] sm:$0xff]
    %v171 = vld [vmem:[%s4] sm:$0x1]
    %v173 = vlaneseq
    %v174 = vshrl.u32 %v173, 7
    %v175 = vsub.s32 0, %v174
    %v176 = vrot.slane %v171, %v175
    %178 = vmatprep.subr.mxu0 0.0
    %179 = vmatpush1.msra.mxu0 %v155
    %180 = vmatprep.subr.mxu0 0.0
    %181 = vmatpush1.msra.mxu0 %v156
    %182 = vmatprep.subr.mxu0 0.0
    %183 = vmatpush1.msra.mxu0 %v157
    %184 = vmatprep.subr.mxu0 0.0
    %185 = vmatpush1.msra.mxu0 %v158
    %186 = vmatprep.subr.mxu0 0.0
    %187 = vmatpush1.msra.mxu0 %v159
    %188 = vmatprep.subr.mxu0 0.0
    %189 = vmatpush1.msra.mxu0 %v160
    %190 = vmatprep.subr.mxu0 0.0
    %191 = vmatpush1.msra.mxu0 %v161
    %192 = vmatprep.subr.mxu0 0.0
    %193 = vmatpush1.msra.mxu0 %v162
    %194 = vmatprep.subr.mxu0 0.0
    %195 = vmatpush1.msra.mxu0 %v163
    %196 = vmatprep.subr.mxu0 0.0
    %197 = vmatpush1.msra.mxu0 %v164
    %198 = vmatprep.subr.mxu0 0.0
    %199 = vmatpush1.msra.mxu0 %v165
    %200 = vmatprep.subr.mxu0 0.0
    %201 = vmatpush1.msra.mxu0 %v166
    %202 = vmatprep.subr.mxu0 0.0
    %203 = vmatpush1.msra.mxu0 %v167
    %204 = vmatprep.subr.mxu0 0.0
    %205 = vmatpush1.msra.mxu0 %v168
    %206 = vmatprep.subr.mxu0 0.0
    %207 = vmatpush1.msra.mxu0 %v169
    %208 = vmatprep.subr.mxu0 0.0
    %209 = vmatpush1.msra.mxu0 %v170
    %210 = vmatprep.subr.mxu0 0.0
    %211 = vmatpush1.msra.mxu0 0.0
    %212 = vmatprep.subr.mxu0 0.0
    %213 = vmatpush1.msra.mxu0 0.0
    %214 = vmatprep.subr.mxu0 0.0
    %215 = vmatpush1.msra.mxu0 0.0
    %216 = vmatprep.subr.mxu0 0.0
    %217 = vmatpush1.msra.mxu0 0.0
    %218 = vmatprep.subr.mxu0 0.0
    %219 = vmatpush1.msra.mxu0 0.0
    %220 = vmatprep.subr.mxu0 0.0
    %221 = vmatpush1.msra.mxu0 0.0
    %222 = vmatprep.subr.mxu0 0.0
    %223 = vmatpush1.msra.mxu0 0.0
    %224 = vmatprep.subr.mxu0 0.0
    %225 = vmatpush1.msra.mxu0 0.0
    %226 = vmatprep.subr.mxu0 0.0
    %227 = vmatpush1.msra.mxu0 0.0
    %228 = vmatprep.subr.mxu0 0.0
    %229 = vmatpush1.msra.mxu0 0.0
    %230 = vmatprep.subr.mxu0 0.0
    %231 = vmatpush1.msra.mxu0 0.0
    %232 = vmatprep.subr.mxu0 0.0
    %233 = vmatpush1.msra.mxu0 0.0
    %234 = vmatprep.subr.mxu0 0.0
    %235 = vmatpush1.msra.mxu0 0.0
    %236 = vmatprep.subr.mxu0 0.0
    %237 = vmatpush1.msra.mxu0 0.0
    %238 = vmatprep.subr.mxu0 0.0
    %239 = vmatpush1.msra.mxu0 0.0
    %240 = vmatprep.subr.mxu0 0.0
    %241 = vmatpush1.msra.mxu0 0.0
    %242 = vmatprep.mubr.f32.mxu0 0.0
    %243 = vmatmul.mubr.f32.gmra.mrb[0].mxu0 %v154
    %v244 = vpop.f32.mrb[0].mxu0
    %v245 = vadd.f32 %v176, %v244
    %v246 = vpop.f32.mrb[0].mxu0
    %247 = vdwg.mxu0
    %248 = vst [vmem:[#allocation8] sm:$0xff] %v245
    // Predicated region
    $region34: #{_mlp_resident.1} parent=1 // pred_check
      _
    $region35: #{_mlp_resident.1} parent=1 // pred_check_branch
      %250 = sbr.rel (0) target = $region37
    $region36: #{_mlp_resident.1} parent=1 // pred_region
      %s252 = ssub.s32 128, 128
      %253 = vsyncadd [#allocation4], %s252
      %s255 = sshll.u32 [#allocation8], 4
      %s256 = int_to_ptr.vmem [resolvable:$true] %s255
      %258 = dma.vmem_to_hbm [thread:$0]  %s256, 128, %s5, [#allocation4]
    $region37: #{_mlp_resident.1} parent=1 // pred_fallthru
      _
    // Predicated region
    $region38: #{_mlp_resident.1} parent=1 // pred_check
      _
    $region39: #{_mlp_resident.1} parent=1 // pred_check_branch
      %260 = sbr.rel (0) target = $region41
    $region40: #{_mlp_resident.1} parent=1 // pred_region
      %261 = dma.done [#allocation4], 128
    $region41: #{_mlp_resident.1} parent=1 // pred_fallthru
      _
    %262 = vsyncpa [#allocation3], 1
    %263 = vsyncpa [#allocation6], 1
    %264 = vsyncpa [#allocation4], 1

</llo_original>
